<compile_context>
chip_gen: v7x
topology: tpu7x:2x2x1
jax: 0.10.0
libtpu: 0.0.40
codegen_flags: <defaults>
</compile_context>

<pallas_src>
import functools

import jax
import jax.numpy as jnp
from jax.experimental import pallas as pl
from jax.experimental.pallas import tpu as pltpu

LANE = 128
SUBLANE = 8


def _round_up(x, m):
    return (x + m - 1) // m * m


def _cdiv(a, b):
    return -(-a // b)


def _tpu_vmem_capacity_bytes():
    """Physical VMEM per TensorCore, with robust fallbacks."""
    try:
        return int(pltpu.get_tpu_info().vmem_capacity_bytes)
    except Exception:
        pass
    try:
        kind = jax.devices()[0].device_kind.lower()
        if "v7" in kind or "7x" in kind:
            return 64 * 1024 * 1024
    except Exception:
        pass
    return 128 * 1024 * 1024  # v5e / v6e


def _num_tensorcores_per_chip():
    try:
        kind = jax.devices()[0].device_kind.lower()
        if "v7" in kind or "7x" in kind:
            return 2
    except Exception:
        pass
    return 1


def _disc_kernel(x_ref, w1_ref, b1_ref, w2_ref, b2_ref, w3_ref, b3_ref, o_ref,
                 *, vpu_tail: bool):
    """Fused forward: sigmoid(sigmoid(sigmoid(x@W1+b1)@W2+b2)@W3+b3) on one batch tile."""
    mdt = w1_ref.dtype                       # MXU operand dtype (f32 or bf16)
    x = x_ref[...].astype(mdt)               # no-op when wrapper already cast x

    h1 = jnp.dot(x, w1_ref[...], preferred_element_type=jnp.float32)
    h1 = jax.nn.sigmoid(h1 + b1_ref[...])    # bias + sigmoid kept in f32 (VPU/EUP)

    h2 = jnp.dot(h1.astype(mdt), w2_ref[...], preferred_element_type=jnp.float32)
    h2 = jax.nn.sigmoid(h2 + b2_ref[...])

    if vpu_tail:
        # out_features == 1: VPU multiply + lane reduce instead of a degenerate Nx1 matmul.
        w3row = w3_ref[...].astype(jnp.float32)                   # (1, h_pad)
        r = jnp.sum(h2 * w3row, axis=-1, keepdims=True)           # (tb, 1)
        o_ref[...] = jax.nn.sigmoid(r + b3_ref[0, 0]).astype(o_ref.dtype)
    else:
        h3 = jnp.dot(h2.astype(mdt), w3_ref[...], preferred_element_type=jnp.float32)
        o_ref[...] = jax.nn.sigmoid(h3 + b3_ref[...]).astype(o_ref.dtype)


def discriminator_forward(x, params, *, matmul_dtype=jnp.bfloat16, max_batch_tile=2048):
    """x: (B, input_size) f32. params: dict w1,b1,w2,b2,w3,b3 (weights as (in, out)).

    matmul_dtype: MXU operand dtype. bf16 (default) halves x/weight HBM traffic and runs
    the MXU at native rate; accumulation and all bias/sigmoid math stay f32.  Use
    jnp.float32 for bit-accurate parity with an f32 reference.
    """
    w1, b1, w2, b2, w3, b3 = (params[k] for k in ("w1", "b1", "w2", "b2", "w3", "b3"))
    B, in_size = x.shape
    hidden = w1.shape[1]
    out_size = w3.shape[1]

    mdt = jnp.dtype(matmul_dtype)
    wbytes = mdt.itemsize
    h_p = _round_up(hidden, LANE)            # lane-align the hidden dim only

    # ---- weights: hidden dims zero-padded (padded activations are annihilated by
    #      the corresponding zero weight rows); x / out feature dims are NOT padded ----
    w1_p = jnp.pad(w1, ((0, 0), (0, h_p - hidden))).astype(mdt)          # (in, h_p)
    b1_p = jnp.pad(b1, ((0, 0), (0, h_p - hidden))).astype(jnp.float32)  # (1, h_p)
    w2_p = jnp.pad(w2, ((0, h_p - hidden), (0, h_p - hidden))).astype(mdt)
    b2_p = jnp.pad(b2, ((0, 0), (0, h_p - hidden))).astype(jnp.float32)

    vpu_tail = (out_size == 1)
    if vpu_tail:
        w3_p = jnp.pad(w3.T, ((0, 0), (0, h_p - hidden))).astype(mdt)    # (1, h_p)
    else:
        w3_p = jnp.pad(w3, ((0, h_p - hidden), (0, 0))).astype(mdt)      # (h_p, out)
    b3_p = b3.astype(jnp.float32)                                        # (1, out)

    # x cast in the wrapper so the DMA'd bytes are already at operand width.
    x_c = x.astype(mdt)
    xbytes = wbytes

    # ---- VMEM budget / limit (consistent), derived from the device ----
    phys = _tpu_vmem_capacity_bytes()
    vmem_limit = min(100 * 1024 * 1024, int(phys * 0.75))
    budget = int(vmem_limit * 0.8)           # headroom for temporaries the model misses

    nbytes = lambda a: a.size * a.dtype.itemsize
    resident = 2 * sum(nbytes(a) for a in (w1_p, b1_p, w2_p, b2_p, w3_p, b3_p))
    # TODO(synk): if `resident` alone exceeds `budget` (very large hidden), tile the
    # hidden dim with an "arbitrary" reduction axis + f32 accumulator instead of letting
    # the batch tile collapse to the minimum.

    out_cols = out_size

    def footprint(tb):
        return (resident
                + 2 * tb * in_size * xbytes      # double-buffered x tile
                + 2 * tb * out_cols * 4          # double-buffered out tile
                + 4 * tb * h_p * 4)              # h1/h2 + sigmoid/cast temporaries (f32)

    # bf16 tiles pack 16 rows per sublane-tile; keep batch blocks aligned accordingly.
    row_align = SUBLANE * max(1, 4 // wbytes)

    tb_cap = _round_up(min(max_batch_tile, _round_up(B, row_align)), row_align)
    while tb_cap > row_align and footprint(tb_cap) > budget:
        tb_cap -= row_align

    # ---- balanced batch tiling (minimal padding) ----
    num_tiles = _cdiv(B, tb_cap)
    n_tc = _num_tensorcores_per_chip()
    if n_tc > 1 and B > row_align:
        # v7x megacore: make the "parallel" batch axis split evenly across both TCs.
        num_tiles = max(num_tiles, n_tc)
        if num_tiles % n_tc:
            num_tiles += n_tc - num_tiles % n_tc
    tb = _round_up(_cdiv(B, num_tiles), row_align)
    b_pad = num_tiles * tb
    if b_pad != B:
        x_c = jnp.pad(x_c, ((0, b_pad - B), (0, 0)))

    # ---- advisory cost estimate for the XLA scheduler ----
    flops = 2 * b_pad * (in_size * h_p + h_p * h_p + h_p * out_size)
    transcendentals = b_pad * (2 * h_p + out_size)
    bytes_accessed = int(b_pad * in_size * xbytes
                         + sum(nbytes(a) for a in (w1_p, b1_p, w2_p, b2_p, w3_p, b3_p))
                         + b_pad * out_cols * 4)

    const = lambda a: pl.BlockSpec(a.shape, lambda i: (0, 0))  # VMEM-resident across steps

    out = pl.pallas_call(
        functools.partial(_disc_kernel, vpu_tail=vpu_tail),
        out_shape=jax.ShapeDtypeStruct((b_pad, out_cols), jnp.float32),
        grid=(num_tiles,),
        in_specs=[pl.BlockSpec((tb, in_size), lambda i: (i, 0)),
                  const(w1_p), const(b1_p),
                  const(w2_p), const(b2_p),
                  const(w3_p), const(b3_p)],
        out_specs=pl.BlockSpec((tb, out_cols), lambda i: (i, 0)),
        compiler_params=pltpu.CompilerParams(
            dimension_semantics=("parallel",),     # megacore sharding on v7x
            vmem_limit_bytes=vmem_limit),
        cost_estimate=pl.CostEstimate(flops=flops,
                                      transcendentals=transcendentals,
                                      bytes_accessed=bytes_accessed),
    )(x_c, w1_p, b1_p, w2_p, b2_p, w3_p, b3_p)

    return out if b_pad == B else out[:B]


def init_params(key, input_size, hidden_size, output_size):
    """PyTorch nn.Linear-style init: U(-1/sqrt(fan_in), 1/sqrt(fan_in))."""
    ks = jax.random.split(key, 6)

    def linear(kw, kb, fan_in, fan_out):
        bound = 1.0 / jnp.sqrt(fan_in)
        w = jax.random.uniform(kw, (fan_in, fan_out), jnp.float32, -bound, bound)
        b = jax.random.uniform(kb, (1, fan_out), jnp.float32, -bound, bound)
        return w, b

    w1, b1 = linear(ks[0], ks[1], input_size, hidden_size)
    w2, b2 = linear(ks[2], ks[3], hidden_size, hidden_size)
    w3, b3 = linear(ks[4], ks[5], hidden_size, output_size)
    return {"w1": w1, "b1": b1, "w2": w2, "b2": b2, "w3": w3, "b3": b3}


def discriminator_ref(x, p):
    """Pure-JAX reference of the PyTorch forward (f = sigmoid)."""
    h = jax.nn.sigmoid(x @ p["w1"] + p["b1"])
    h = jax.nn.sigmoid(h @ p["w2"] + p["b2"])
    return jax.nn.sigmoid(h @ p["w3"] + p["b3"])


if __name__ == "__main__":
    key = jax.random.PRNGKey(0)
    kx, kp, kx2, kp2, kx3, kp3 = jax.random.split(key, 6)

    # --- small shapes consistent with the module: B=8, in=16, hidden=32, out=1 ---
    B, input_size, hidden_size, output_size = 8, 16, 32, 1
    x = jax.random.normal(kx, (B, input_size), jnp.float32)
    params = init_params(kp, input_size, hidden_size, output_size)
    ref = discriminator_ref(x, params)

    out_f32 = jax.block_until_ready(
        discriminator_forward(x, params, matmul_dtype=jnp.float32))
    assert out_f32.shape == (B, output_size), out_f32.shape
    assert jnp.allclose(out_f32, ref, atol=1e-5, rtol=1e-5), "f32 mismatch vs reference"

    out_bf16 = jax.block_until_ready(discriminator_forward(x, params))  # default bf16 MXU ops
    assert jnp.allclose(out_bf16, ref, atol=2e-2, rtol=2e-2), "bf16 mismatch vs reference"

    # --- larger batch, forced multi-tile grid (balanced tiles + batch remainder) ---
    B2, in2, h2, out2 = 1200, 64, 128, 1
    x2 = jax.random.normal(kx2, (B2, in2), jnp.float32)
    params2 = init_params(kp2, in2, h2, out2)
    out2_k = jax.block_until_ready(
        discriminator_forward(x2, params2, matmul_dtype=jnp.float32, max_batch_tile=256))
    ref2 = discriminator_ref(x2, params2)
    assert out2_k.shape == (B2, out2), out2_k.shape
    assert jnp.allclose(out2_k, ref2, atol=1e-5, rtol=1e-5), "tiled mismatch vs reference"

    # --- out_features > 1 exercises the MXU third-layer path (unpadded out dim) ---
    B3, in3, h3, out3 = 64, 32, 64, 4
    x3 = jax.random.normal(kx3, (B3, in3), jnp.float32)
    params3 = init_params(kp3, in3, h3, out3)
    out3_k = jax.block_until_ready(
        discriminator_forward(x3, params3, matmul_dtype=jnp.float32))
    ref3 = discriminator_ref(x3, params3)
    assert out3_k.shape == (B3, out3), out3_k.shape
    assert jnp.allclose(out3_k, ref3, atol=1e-5, rtol=1e-5), "out>1 mismatch vs reference"

    print("KERNEL_OK")
</pallas_src>

<mosaic_0001>
module attributes {stable_mosaic.version = 11 : i64} {
  func.func @_disc_kernel(%arg0: i32, %arg1: memref<8x16xf32, #tpu.memory_space<vmem>>, %arg2: memref<16x128xf32, #tpu.memory_space<vmem>>, %arg3: memref<1x128xf32, #tpu.memory_space<vmem>>, %arg4: memref<128x128xf32, #tpu.memory_space<vmem>>, %arg5: memref<1x128xf32, #tpu.memory_space<vmem>>, %arg6: memref<1x128xf32, #tpu.memory_space<vmem>>, %arg7: memref<1x1xf32, #tpu.memory_space<vmem>>, %arg8: memref<8x1xf32, #tpu.memory_space<vmem>>) attributes {dimension_semantics = [#tpu.dimension_semantics<parallel>], iteration_bounds = array<i64: 1>, scalar_prefetch = 0 : i64, scratch_operands = 0 : i64, tpu.core_type = #tpu.core_type<tc>, window_params = [{transform_indices = @transform_0, window_bounds = array<i64: 8, 16>}, {pipeline_mode = #tpu.pipeline_mode<synchronous>, transform_indices = @transform_1, window_bounds = array<i64: 16, 128>}, {pipeline_mode = #tpu.pipeline_mode<synchronous>, transform_indices = @transform_2, window_bounds = array<i64: 1, 128>}, {pipeline_mode = #tpu.pipeline_mode<synchronous>, transform_indices = @transform_3, window_bounds = array<i64: 128, 128>}, {pipeline_mode = #tpu.pipeline_mode<synchronous>, transform_indices = @transform_4, window_bounds = array<i64: 1, 128>}, {pipeline_mode = #tpu.pipeline_mode<synchronous>, transform_indices = @transform_5, window_bounds = array<i64: 1, 128>}, {pipeline_mode = #tpu.pipeline_mode<synchronous>, transform_indices = @transform_6, window_bounds = array<i64: 1, 1>}, {transform_indices = @transform_7, window_bounds = array<i64: 8, 1>}]} {
    %c0 = arith.constant 0 : index
    %c0_0 = arith.constant 0 : index
    %0 = vector.load %arg1[%c0, %c0_0] : memref<8x16xf32, #tpu.memory_space<vmem>>, vector<8x16xf32>
    %c0_1 = arith.constant 0 : index
    %c0_2 = arith.constant 0 : index
    %1 = vector.load %arg2[%c0_1, %c0_2] : memref<16x128xf32, #tpu.memory_space<vmem>>, vector<16x128xf32>
    %cst = arith.constant dense<0.000000e+00> : vector<8x128xf32>
    %2 = tpu.matmul %0, %1, %cst {dimension_numbers = #tpu.dot_dimension_numbers<[1], [0], [0], [1], [0, 0, 1, 1], [], []>} : vector<8x16xf32>, vector<16x128xf32>, vector<8x128xf32> -> vector<8x128xf32>
    %c0_3 = arith.constant 0 : index
    %c0_4 = arith.constant 0 : index
    %3 = vector.load %arg3[%c0_3, %c0_4] : memref<1x128xf32, #tpu.memory_space<vmem>>, vector<1x128xf32>
    %4 = vector.broadcast %3 : vector<1x128xf32> to vector<8x128xf32>
    %5 = arith.addf %2, %4 : vector<8x128xf32>
    %6 = arith.negf %5 : vector<8x128xf32>
    %7 = math.exp %6 : vector<8x128xf32>
    %cst_5 = arith.constant 1.000000e+00 : f32
    %8 = vector.broadcast %cst_5 : f32 to vector<8x128xf32>
    %9 = arith.addf %8, %7 : vector<8x128xf32>
    %10 = arith.divf %8, %9 : vector<8x128xf32>
    %c0_6 = arith.constant 0 : index
    %c0_7 = arith.constant 0 : index
    %11 = vector.load %arg4[%c0_6, %c0_7] : memref<128x128xf32, #tpu.memory_space<vmem>>, vector<128x128xf32>
    %cst_8 = arith.constant dense<0.000000e+00> : vector<8x128xf32>
    %12 = tpu.matmul %10, %11, %cst_8 {dimension_numbers = #tpu.dot_dimension_numbers<[1], [0], [0], [1], [0, 0, 1, 1], [], []>} : vector<8x128xf32>, vector<128x128xf32>, vector<8x128xf32> -> vector<8x128xf32>
    %c0_9 = arith.constant 0 : index
    %c0_10 = arith.constant 0 : index
    %13 = vector.load %arg5[%c0_9, %c0_10] : memref<1x128xf32, #tpu.memory_space<vmem>>, vector<1x128xf32>
    %14 = vector.broadcast %13 : vector<1x128xf32> to vector<8x128xf32>
    %15 = arith.addf %12, %14 : vector<8x128xf32>
    %16 = arith.negf %15 : vector<8x128xf32>
    %17 = math.exp %16 : vector<8x128xf32>
    %cst_11 = arith.constant 1.000000e+00 : f32
    %18 = vector.broadcast %cst_11 : f32 to vector<8x128xf32>
    %19 = arith.addf %18, %17 : vector<8x128xf32>
    %20 = arith.divf %18, %19 : vector<8x128xf32>
    %c0_12 = arith.constant 0 : index
    %c0_13 = arith.constant 0 : index
    %21 = vector.load %arg6[%c0_12, %c0_13] : memref<1x128xf32, #tpu.memory_space<vmem>>, vector<1x128xf32>
    %22 = vector.broadcast %21 : vector<1x128xf32> to vector<8x128xf32>
    %23 = arith.mulf %20, %22 : vector<8x128xf32>
    %cst_14 = arith.constant dense<0.000000e+00> : vector<8xf32>
    %24 = vector.multi_reduction <add>, %23, %cst_14 [1] : vector<8x128xf32> to vector<8xf32>
    %25 = vector.shape_cast %24 : vector<8xf32> to vector<8x1xf32>
    %c0_15 = arith.constant 0 : index
    %c0_16 = arith.constant 0 : index
    %26 = vector.load %arg7[%c0_15, %c0_16] : memref<1x1xf32, #tpu.memory_space<vmem>>, vector<1x1xf32>
    %27 = vector.extract %26[0, 0] : f32 from vector<1x1xf32>
    %28 = vector.broadcast %27 : f32 to vector<8x1xf32>
    %29 = arith.addf %25, %28 : vector<8x1xf32>
    %30 = arith.negf %29 : vector<8x1xf32>
    %31 = math.exp %30 : vector<8x1xf32>
    %cst_17 = arith.constant 1.000000e+00 : f32
    %32 = vector.broadcast %cst_17 : f32 to vector<8x1xf32>
    %33 = arith.addf %32, %31 : vector<8x1xf32>
    %34 = arith.divf %32, %33 : vector<8x1xf32>
    %c0_18 = arith.constant 0 : index
    %c0_19 = arith.constant 0 : index
    %35 = vector.load %arg8[%c0_18, %c0_19] : memref<8x1xf32, #tpu.memory_space<vmem>>, vector<8x1xf32>
    tpu.vector_store %arg8[%c0_18, %c0_19], %34 {strides = array<i32>} : memref<8x1xf32, #tpu.memory_space<vmem>>, vector<8x1xf32>,
    return
  }
  func.func @transform_0(%arg0: i32) -> (i32, i32) {
    %c0_i32 = arith.constant 0 : i32
    %c0_i32_0 = arith.constant 0 : i32
    return %arg0, %c0_i32 : i32, i32
  }
  func.func @transform_1(%arg0: i32) -> (i32, i32) {
    %c0_i32 = arith.constant 0 : i32
    %c0_i32_0 = arith.constant 0 : i32
    %c0_i32_1 = arith.constant 0 : i32
    return %c0_i32, %c0_i32_0 : i32, i32
  }
  func.func @transform_2(%arg0: i32) -> (i32, i32) {
    %c0_i32 = arith.constant 0 : i32
    %c0_i32_0 = arith.constant 0 : i32
    %c0_i32_1 = arith.constant 0 : i32
    return %c0_i32, %c0_i32_0 : i32, i32
  }
  func.func @transform_3(%arg0: i32) -> (i32, i32) {
    %c0_i32 = arith.constant 0 : i32
    %c0_i32_0 = arith.constant 0 : i32
    %c0_i32_1 = arith.constant 0 : i32
    return %c0_i32, %c0_i32_0 : i32, i32
  }
  func.func @transform_4(%arg0: i32) -> (i32, i32) {
    %c0_i32 = arith.constant 0 : i32
    %c0_i32_0 = arith.constant 0 : i32
    %c0_i32_1 = arith.constant 0 : i32
    return %c0_i32, %c0_i32_0 : i32, i32
  }
  func.func @transform_5(%arg0: i32) -> (i32, i32) {
    %c0_i32 = arith.constant 0 : i32
    %c0_i32_0 = arith.constant 0 : i32
    %c0_i32_1 = arith.constant 0 : i32
    return %c0_i32, %c0_i32_0 : i32, i32
  }
  func.func @transform_6(%arg0: i32) -> (i32, i32) {
    %c0_i32 = arith.constant 0 : i32
    %c0_i32_0 = arith.constant 0 : i32
    %c0_i32_1 = arith.constant 0 : i32
    return %c0_i32, %c0_i32_0 : i32, i32
  }
  func.func @transform_7(%arg0: i32) -> (i32, i32) {
    %c0_i32 = arith.constant 0 : i32
    %c0_i32_0 = arith.constant 0 : i32
    return %arg0, %c0_i32 : i32, i32
  }
}

</mosaic_0001>

<llo_original>
// kernel: tpu_custom_call.1
$region0: #{tpu_custom_call.1}
  #allocation0 [shape = 'u32[]', space=smem, size = 0x4, offset = 0x4, fixed_abs, tag = 'smem constant byte address 0x4 - core index']
  #allocation1 [shape = 'u32[144,128]{1,0:T(1,128)}', space=vmem, size = 0x12000, scoped, tag = 'internal scratch']
  #allocation2 [shape = 'f32[1,1]{1,0:T(1,128)S(1)}', space=vmem, size = 0x200, scoped, tag = 'scoped memory for tpu_custom_call.1']
  %s0 = inlined_call_operand.hbm [shape: f32[8,16], index: 0, kind: input, shape index: {}]
  %s1 = inlined_call_operand.hbm [shape: f32[16,128], index: 1, kind: input, shape index: {}]
  %s2 = inlined_call_operand.hbm [shape: f32[1,128], index: 2, kind: input, shape index: {}]
  %s3 = inlined_call_operand.hbm [shape: f32[128,128], index: 3, kind: input, shape index: {}]
  %s4 = inlined_call_operand.hbm [shape: f32[1,128], index: 4, kind: input, shape index: {}]
  %s5 = inlined_call_operand.hbm [shape: f32[1,128], index: 5, kind: input, shape index: {}]
  %s6 = inlined_call_operand.<no memory space> [shape: f32[1,1], index: 6, kind: input, shape index: {}]
  %s7 = inlined_call_operand.hbm [shape: f32[8,1], index: 7, kind: output, shape index: {}]
  %s8 = sld [smem:[#allocation0]]
  $region62: #{tpu_custom_call.1} parent=0
    _
  %s10 = ssub.s32 1, %s8
  %s11 = scalar_select 0, %s10, %s8
  %v12 = vstv %s6
  %13 = vst [vmem:[#allocation2] sm:$0x1] %v12
  $region1: #{tpu_custom_call.1} parent=0
    #allocation3 [shape = 'u8[4096]{0}', space=vmem, size = 0x1000, scoped, tag = 'input window, operand 0, single buffered']
    #allocation4 [shape = 's32[1]{0}', space=sflag, size = 0x4, scoped, tag = 'scoped memory for tpu_custom_call.1']
    #allocation5 [shape = 's32[1]{0}', space=sflag, size = 0x4, scoped, tag = 'scoped memory for tpu_custom_call.1']
    #allocation6 [shape = 'u8[8192]{0}', space=vmem, size = 0x2000, scoped, tag = 'input window, operand 1, single buffered']
    #allocation7 [shape = 's32[1]{0}', space=sflag, size = 0x4, scoped, tag = 'scoped memory for tpu_custom_call.1']
    #allocation8 [shape = 'u8[512]{0}', space=vmem, size = 0x400, scoped, tag = 'input window, operand 2, single buffered']
    #allocation9 [shape = 'u8[65536]{0}', space=vmem, size = 0x10000, scoped, tag = 'input window, operand 3, single buffered']
    #allocation10 [shape = 's32[1]{0}', space=sflag, size = 0x4, scoped, tag = 'scoped memory for tpu_custom_call.1']
    #allocation11 [shape = 'u8[512]{0}', space=vmem, size = 0x400, scoped, tag = 'input window, operand 4, single buffered']
    #allocation12 [shape = 'u8[512]{0}', space=vmem, size = 0x400, scoped, tag = 'input window, operand 5, single buffered']
    #allocation13 [shape = 's32[1]{0}', space=sflag, size = 0x4, scoped, tag = 'scoped memory for tpu_custom_call.1']
    #allocation14 [shape = 'u8[4096]{0}', space=vmem, size = 0x1000, scoped, tag = 'output window, operand 0, single buffered']
    %14 = vsyncpa [#allocation4], 0
    %15 = vsyncpa [#allocation7], 0
    %16 = vsyncpa [#allocation10], 0
    %17 = vsyncpa [#allocation13], 0
    %18 = vsyncpa [#allocation5], 0
    // Predicated region
    $region2: #{tpu_custom_call.1} parent=1 // pred_check
      _
    $region3: #{tpu_custom_call.1} parent=1 // pred_check_branch
      %20 = sbr.rel (0) target = $region5
    $region4: #{tpu_custom_call.1} parent=1 // pred_region
      %s22 = ssub.s32 128, 128
      %23 = vsyncadd [#allocation4], %s22
      %s25 = sshll.u32 [#allocation3], 4
      %s26 = int_to_ptr.vmem [resolvable:$true] %s25
      %28 = dma.hbm_to_vmem [thread:$0]  %s0, 128, %s26, [#allocation4]
    $region5: #{tpu_custom_call.1} parent=1 // pred_fallthru
      _
    // Predicated region
    $region6: #{tpu_custom_call.1} parent=1 // pred_check
      _
    $region7: #{tpu_custom_call.1} parent=1 // pred_check_branch
      %30 = sbr.rel (0) target = $region9
    $region8: #{tpu_custom_call.1} parent=1 // pred_region
      %s32 = ssub.s32 256, 256
      %33 = vsyncadd [#allocation7], %s32
      %s34 = sshll.u32 [#allocation6], 4
      %s35 = int_to_ptr.vmem [resolvable:$true] %s34
      %40 = dma.hbm_to_vmem [thread:$0]  %s1, 256, %s35, [#allocation7], 128, 128, 8
    $region9: #{tpu_custom_call.1} parent=1 // pred_fallthru
      _
    // Predicated region
    $region10: #{tpu_custom_call.1} parent=1 // pred_check
      _
    $region11: #{tpu_custom_call.1} parent=1 // pred_check_branch
      %42 = sbr.rel (0) target = $region13
    $region12: #{tpu_custom_call.1} parent=1 // pred_region
      %s44 = ssub.s32 16, 16
      %45 = vsyncadd [#allocation7], %s44
      %s47 = sshll.u32 [#allocation8], 4
      %s48 = int_to_ptr.vmem [resolvable:$true] %s47
      %50 = dma.hbm_to_vmem [thread:$0]  %s2, 16, %s48, [#allocation7]
    $region13: #{tpu_custom_call.1} parent=1 // pred_fallthru
      _
    // Predicated region
    $region14: #{tpu_custom_call.1} parent=1 // pred_check
      _
    $region15: #{tpu_custom_call.1} parent=1 // pred_check_branch
      %52 = sbr.rel (0) target = $region17
    $region16: #{tpu_custom_call.1} parent=1 // pred_region
      %s54 = ssub.s32 2048, 2048
      %55 = vsyncadd [#allocation10], %s54
      %s56 = sshll.u32 [#allocation9], 4
      %s57 = int_to_ptr.vmem [resolvable:$true] %s56
      %62 = dma.hbm_to_vmem [thread:$0]  %s3, 2048, %s57, [#allocation10], 128, 128, 8
    $region17: #{tpu_custom_call.1} parent=1 // pred_fallthru
      _
    // Predicated region
    $region18: #{tpu_custom_call.1} parent=1 // pred_check
      _
    $region19: #{tpu_custom_call.1} parent=1 // pred_check_branch
      %64 = sbr.rel (0) target = $region21
    $region20: #{tpu_custom_call.1} parent=1 // pred_region
      %s66 = ssub.s32 16, 16
      %67 = vsyncadd [#allocation10], %s66
      %s69 = sshll.u32 [#allocation11], 4
      %s70 = int_to_ptr.vmem [resolvable:$true] %s69
      %72 = dma.hbm_to_vmem [thread:$0]  %s4, 16, %s70, [#allocation10]
    $region21: #{tpu_custom_call.1} parent=1 // pred_fallthru
      _
    // Predicated region
    $region22: #{tpu_custom_call.1} parent=1 // pred_check
      _
    $region23: #{tpu_custom_call.1} parent=1 // pred_check_branch
      %74 = sbr.rel (0) target = $region25
    $region24: #{tpu_custom_call.1} parent=1 // pred_region
      %s76 = ssub.s32 16, 16
      %77 = vsyncadd [#allocation13], %s76
      %s79 = sshll.u32 [#allocation12], 4
      %s80 = int_to_ptr.vmem [resolvable:$true] %s79
      %82 = dma.hbm_to_vmem [thread:$0]  %s5, 16, %s80, [#allocation13]
    $region25: #{tpu_custom_call.1} parent=1 // pred_fallthru
      _
    // Predicated region
    $region26: #{tpu_custom_call.1} parent=1 // pred_check
      _
    $region27: #{tpu_custom_call.1} parent=1 // pred_check_branch
      %84 = sbr.rel (0) target = $region29
    $region28: #{tpu_custom_call.1} parent=1 // pred_region
      _
    $region29: #{tpu_custom_call.1} parent=1 // pred_fallthru
      _
    // Predicated region
    $region30: #{tpu_custom_call.1} parent=1 // pred_check
      _
    $region31: #{tpu_custom_call.1} parent=1 // pred_check_branch
      %86 = sbr.rel (0) target = $region33
    $region32: #{tpu_custom_call.1} parent=1 // pred_region
      %87 = dma.done [#allocation4], 128
    $region33: #{tpu_custom_call.1} parent=1 // pred_fallthru
      _
    // Predicated region
    $region34: #{tpu_custom_call.1} parent=1 // pred_check
      _
    $region35: #{tpu_custom_call.1} parent=1 // pred_check_branch
      %89 = sbr.rel (0) target = $region37
    $region36: #{tpu_custom_call.1} parent=1 // pred_region
      %90 = dma.done [#allocation7], 256
    $region37: #{tpu_custom_call.1} parent=1 // pred_fallthru
      _
    // Predicated region
    $region38: #{tpu_custom_call.1} parent=1 // pred_check
      _
    $region39: #{tpu_custom_call.1} parent=1 // pred_check_branch
      %92 = sbr.rel (0) target = $region41
    $region40: #{tpu_custom_call.1} parent=1 // pred_region
      %93 = dma.done [#allocation7], 16
    $region41: #{tpu_custom_call.1} parent=1 // pred_fallthru
      _
    // Predicated region
    $region42: #{tpu_custom_call.1} parent=1 // pred_check
      _
    $region43: #{tpu_custom_call.1} parent=1 // pred_check_branch
      %95 = sbr.rel (0) target = $region45
    $region44: #{tpu_custom_call.1} parent=1 // pred_region
      %96 = dma.done [#allocation10], 2048
    $region45: #{tpu_custom_call.1} parent=1 // pred_fallthru
      _
    // Predicated region
    $region46: #{tpu_custom_call.1} parent=1 // pred_check
      _
    $region47: #{tpu_custom_call.1} parent=1 // pred_check_branch
      %98 = sbr.rel (0) target = $region49
    $region48: #{tpu_custom_call.1} parent=1 // pred_region
      %99 = dma.done [#allocation10], 16
    $region49: #{tpu_custom_call.1} parent=1 // pred_fallthru
      _
    // Predicated region
    $region50: #{tpu_custom_call.1} parent=1 // pred_check
      _
    $region51: #{tpu_custom_call.1} parent=1 // pred_check_branch
      %101 = sbr.rel (0) target = $region53
    $region52: #{tpu_custom_call.1} parent=1 // pred_region
      %102 = dma.done [#allocation13], 16
    $region53: #{tpu_custom_call.1} parent=1 // pred_fallthru
      _
    %v103 = vld [vmem:[#allocation3] sm:$0xff]
    %v104 = vld [vmem:[#allocation6] sm:$0xff]
    %v105 = vld [vmem:[#allocation6 + $0x8] sm:$0xff]
    %v106 = vld [vmem:[#allocation8] sm:$0x1]
    %v108 = vlaneseq
    %v109 = vshrl.u32 %v108, 7
    %v110 = vsub.s32 0, %v109
    %v111 = vrot.slane %v106, %v110
    %vm113 = vcmask 130048
    %v115 = vsel %vm113, %v103, 0
    %117 = vmatprep.subr.mxu0 0.0
    %118 = vmatpush1.msra.mxu0 %v104
    %119 = vmatprep.subr.mxu0 0.0
    %120 = vmatpush1.msra.mxu0 %v105
    %121 = vmatprep.subr.mxu0 0.0
    %122 = vmatpush1.msra.mxu0 0.0
    %123 = vmatprep.subr.mxu0 0.0
    %124 = vmatpush1.msra.mxu0 0.0
    %125 = vmatprep.subr.mxu0 0.0
    %126 = vmatpush1.msra.mxu0 0.0
    %127 = vmatprep.subr.mxu0 0.0
    %128 = vmatpush1.msra.mxu0 0.0
    %129 = vmatprep.subr.mxu0 0.0
    %130 = vmatpush1.msra.mxu0 0.0
    %131 = vmatprep.subr.mxu0 0.0
    %132 = vmatpush1.msra.mxu0 0.0
    %133 = vmatprep.subr.mxu0 0.0
    %134 = vmatpush1.msra.mxu0 0.0
    %135 = vmatprep.subr.mxu0 0.0
    %136 = vmatpush1.msra.mxu0 0.0
    %137 = vmatprep.subr.mxu0 0.0
    %138 = vmatpush1.msra.mxu0 0.0
    %139 = vmatprep.subr.mxu0 0.0
    %140 = vmatpush1.msra.mxu0 0.0
    %141 = vmatprep.subr.mxu0 0.0
    %142 = vmatpush1.msra.mxu0 0.0
    %143 = vmatprep.subr.mxu0 0.0
    %144 = vmatpush1.msra.mxu0 0.0
    %145 = vmatprep.subr.mxu0 0.0
    %146 = vmatpush1.msra.mxu0 0.0
    %147 = vmatprep.subr.mxu0 0.0
    %148 = vmatpush1.msra.mxu0 0.0
    %149 = vmatprep.subr.mxu0 0.0
    %150 = vmatpush1.msra.mxu0 0.0
    %151 = vmatprep.subr.mxu0 0.0
    %152 = vmatpush1.msra.mxu0 0.0
    %153 = vmatprep.subr.mxu0 0.0
    %154 = vmatpush1.msra.mxu0 0.0
    %155 = vmatprep.subr.mxu0 0.0
    %156 = vmatpush1.msra.mxu0 0.0
    %157 = vmatprep.subr.mxu0 0.0
    %158 = vmatpush1.msra.mxu0 0.0
    %159 = vmatprep.subr.mxu0 0.0
    %160 = vmatpush1.msra.mxu0 0.0
    %161 = vmatprep.subr.mxu0 0.0
    %162 = vmatpush1.msra.mxu0 0.0
    %163 = vmatprep.subr.mxu0 0.0
    %164 = vmatpush1.msra.mxu0 0.0
    %165 = vmatprep.subr.mxu0 0.0
    %166 = vmatpush1.msra.mxu0 0.0
    %167 = vmatprep.subr.mxu0 0.0
    %168 = vmatpush1.msra.mxu0 0.0
    %169 = vmatprep.subr.mxu0 0.0
    %170 = vmatpush1.msra.mxu0 0.0
    %171 = vmatprep.subr.mxu0 0.0
    %172 = vmatpush1.msra.mxu0 0.0
    %173 = vmatprep.subr.mxu0 0.0
    %174 = vmatpush1.msra.mxu0 0.0
    %175 = vmatprep.subr.mxu0 0.0
    %176 = vmatpush1.msra.mxu0 0.0
    %177 = vmatprep.subr.mxu0 0.0
    %178 = vmatpush1.msra.mxu0 0.0
    %179 = vmatprep.subr.mxu0 0.0
    %180 = vmatpush1.msra.mxu0 0.0
    %181 = vmatprep.mubr.f32.mxu0 0.0
    %182 = vmatmul.mubr.f32.gmra.mrb[0].mxu0 %v115
    %v183 = vpop.f32.mrb[0].mxu0
    %v184 = vadd.f32 %v111, %v183
    %v185 = vpop.f32.mrb[0].mxu0
    %186 = vdwg.mxu0
    %v187 = vxor.u32 %v184, 2147483648
    %v188 = vmul.f32 %v187, 1.442695
    %v189 = vpow.pop %v188
    %v190 = vadd.f32 %v189, 1.0
    %v191 = vrcp.pop %v190
    %v192 = vmul.f32 1.0, %v191
    %v193 = vld [vmem:[#allocation9] sm:$0xff]
    %v194 = vld [vmem:[#allocation9 + $0x8] sm:$0xff]
    %v195 = vld [vmem:[#allocation9 + $0x10] sm:$0xff]
    %v196 = vld [vmem:[#allocation9 + $0x18] sm:$0xff]
    %v197 = vld [vmem:[#allocation9 + $0x20] sm:$0xff]
    %v198 = vld [vmem:[#allocation9 + $0x28] sm:$0xff]
    %v199 = vld [vmem:[#allocation9 + $0x30] sm:$0xff]
    %v200 = vld [vmem:[#allocation9 + $0x38] sm:$0xff]
    %v201 = vld [vmem:[#allocation9 + $0x40] sm:$0xff]
    %v202 = vld [vmem:[#allocation9 + $0x48] sm:$0xff]
    %v203 = vld [vmem:[#allocation9 + $0x50] sm:$0xff]
    %v204 = vld [vmem:[#allocation9 + $0x58] sm:$0xff]
    %v205 = vld [vmem:[#allocation9 + $0x60] sm:$0xff]
    %v206 = vld [vmem:[#allocation9 + $0x68] sm:$0xff]
    %v207 = vld [vmem:[#allocation9 + $0x70] sm:$0xff]
    %v208 = vld [vmem:[#allocation9 + $0x78] sm:$0xff]
    %v209 = vld [vmem:[#allocation11] sm:$0x1]
    %v211 = vlaneseq
    %v212 = vshrl.u32 %v211, 7
    %v213 = vsub.s32 0, %v212
    %v214 = vrot.slane %v209, %v213
    %216 = vmatprep.subr.mxu0 0.0
    %217 = vmatpush1.msra.mxu0 %v193
    %218 = vmatprep.subr.mxu0 0.0
    %219 = vmatpush1.msra.mxu0 %v194
    %220 = vmatprep.subr.mxu0 0.0
    %221 = vmatpush1.msra.mxu0 %v195
    %222 = vmatprep.subr.mxu0 0.0
    %223 = vmatpush1.msra.mxu0 %v196
    %224 = vmatprep.subr.mxu0 0.0
    %225 = vmatpush1.msra.mxu0 %v197
    %226 = vmatprep.subr.mxu0 0.0
    %227 = vmatpush1.msra.mxu0 %v198
    %228 = vmatprep.subr.mxu0 0.0
    %229 = vmatpush1.msra.mxu0 %v199
    %230 = vmatprep.subr.mxu0 0.0
    %231 = vmatpush1.msra.mxu0 %v200
    %232 = vmatprep.subr.mxu0 0.0
    %233 = vmatpush1.msra.mxu0 %v201
    %234 = vmatprep.subr.mxu0 0.0
    %235 = vmatpush1.msra.mxu0 %v202
    %236 = vmatprep.subr.mxu0 0.0
    %237 = vmatpush1.msra.mxu0 %v203
    %238 = vmatprep.subr.mxu0 0.0
    %239 = vmatpush1.msra.mxu0 %v204
    %240 = vmatprep.subr.mxu0 0.0
    %241 = vmatpush1.msra.mxu0 %v205
    %242 = vmatprep.subr.mxu0 0.0
    %243 = vmatpush1.msra.mxu0 %v206
    %244 = vmatprep.subr.mxu0 0.0
    %245 = vmatpush1.msra.mxu0 %v207
    %246 = vmatprep.subr.mxu0 0.0
    %247 = vmatpush1.msra.mxu0 %v208
    %248 = vmatprep.subr.mxu0 0.0
    %249 = vmatpush1.msra.mxu0 0.0
    %250 = vmatprep.subr.mxu0 0.0
    %251 = vmatpush1.msra.mxu0 0.0
    %252 = vmatprep.subr.mxu0 0.0
    %253 = vmatpush1.msra.mxu0 0.0
    %254 = vmatprep.subr.mxu0 0.0
    %255 = vmatpush1.msra.mxu0 0.0
    %256 = vmatprep.subr.mxu0 0.0
    %257 = vmatpush1.msra.mxu0 0.0
    %258 = vmatprep.subr.mxu0 0.0
    %259 = vmatpush1.msra.mxu0 0.0
    %260 = vmatprep.subr.mxu0 0.0
    %261 = vmatpush1.msra.mxu0 0.0
    %262 = vmatprep.subr.mxu0 0.0
    %263 = vmatpush1.msra.mxu0 0.0
    %264 = vmatprep.subr.mxu0 0.0
    %265 = vmatpush1.msra.mxu0 0.0
    %266 = vmatprep.subr.mxu0 0.0
    %267 = vmatpush1.msra.mxu0 0.0
    %268 = vmatprep.subr.mxu0 0.0
    %269 = vmatpush1.msra.mxu0 0.0
    %270 = vmatprep.subr.mxu0 0.0
    %271 = vmatpush1.msra.mxu0 0.0
    %272 = vmatprep.subr.mxu0 0.0
    %273 = vmatpush1.msra.mxu0 0.0
    %274 = vmatprep.subr.mxu0 0.0
    %275 = vmatpush1.msra.mxu0 0.0
    %276 = vmatprep.subr.mxu0 0.0
    %277 = vmatpush1.msra.mxu0 0.0
    %278 = vmatprep.subr.mxu0 0.0
    %279 = vmatpush1.msra.mxu0 0.0
    %280 = vmatprep.mubr.f32.mxu0 0.0
    %281 = vmatmul.mubr.f32.gmra.mrb[0].mxu0 %v192
    %v282 = vpop.f32.mrb[0].mxu0
    %v283 = vadd.f32 %v214, %v282
    %v284 = vpop.f32.mrb[0].mxu0
    %285 = vdwg.mxu0
    %v286 = vxor.u32 %v283, 2147483648
    %v287 = vmul.f32 %v286, 1.442695
    %v288 = vpow.pop %v287
    %v289 = vadd.f32 %v288, 1.0
    %v290 = vrcp.pop %v289
    %v291 = vmul.f32 1.0, %v290
    %v292 = vld [vmem:[#allocation12] sm:$0x1]
    %v294 = vlaneseq
    %v295 = vshrl.u32 %v294, 7
    %v296 = vsub.s32 0, %v295
    %v297 = vrot.slane %v292, %v296
    %v299 = vmul.f32 %v291, %v297
    %300 = vadd.xlane.f32.xlu0 %v299
    %v301 = vpop.xlane.xlu0 %300
    %v302 = vld [vmem:[#allocation2] sm:$0x1]
    %s303 = vtos %v302
    %v304 = vstv %s303
    %v305 = vadd.f32 %v301, %v304
    %v306 = vxor.u32 %v305, 2147483648
    %v307 = vmul.f32 %v306, 1.442695
    %v308 = vpow.pop %v307
    %v309 = vadd.f32 %v308, 1.0
    %v310 = vrcp.pop %v309
    %v311 = vmul.f32 1.0, %v310
    %vm312 = vcmask 7168
    %313 = vst.msk [vmem:[#allocation14] sm:$0xff] %vm312, %v311
    // Predicated region
    $region54: #{tpu_custom_call.1} parent=1 // pred_check
      _
    $region55: #{tpu_custom_call.1} parent=1 // pred_check_branch
      %315 = sbr.rel (0) target = $region57
    $region56: #{tpu_custom_call.1} parent=1 // pred_region
      %s317 = ssub.s32 128, 128
      %318 = vsyncadd [#allocation5], %s317
      %s320 = sshll.u32 [#allocation14], 4
      %s321 = int_to_ptr.vmem [resolvable:$true] %s320
      %323 = dma.vmem_to_hbm [thread:$0]  %s321, 128, %s7, [#allocation5]
    $region57: #{tpu_custom_call.1} parent=1 // pred_fallthru
      _
    // Predicated region
    $region58: #{tpu_custom_call.1} parent=1 // pred_check
      _
    $region59: #{tpu_custom_call.1} parent=1 // pred_check_branch
      %325 = sbr.rel (0) target = $region61
    $region60: #{tpu_custom_call.1} parent=1 // pred_region
      %326 = dma.done [#allocation5], 128
    $region61: #{tpu_custom_call.1} parent=1 // pred_fallthru
      _
    %327 = vsyncpa [#allocation4], 1
    %328 = vsyncpa [#allocation7], 1
    %329 = vsyncpa [#allocation10], 1
    %330 = vsyncpa [#allocation13], 1
    %331 = vsyncpa [#allocation5], 1

</llo_original>
